<compile_context>
chip_gen: v7x
topology: tpu7x:2x2x1
jax: 0.10.0
libtpu: 0.0.40
codegen_flags: <defaults>
</compile_context>

<pallas_src>
import jax
import jax.numpy as jnp
from jax.experimental import pallas as pl
from jax.experimental.pallas import tpu as pltpu

KH, KW = 3, 3


def _conv3x3_relu_kernel(w_ref, p_ref, o_ref):
    """matmul + ReLU + aligned stores.

    w_ref : (Cout, K+1)        weights with bias column appended
    p_ref : (K+1, N*HoWo_pad)  im2col patch matrix with ones row appended
    o_ref : (N, Cout, HoWo_pad)
    """
    res = jnp.dot(w_ref[...], p_ref[...],
                  preferred_element_type=jnp.float32)        # (Cout, N*HoWo_pad)
    res = jnp.maximum(res, 0.0)                              # ReLU (bias already in)

    n_img, _, hwp = o_ref.shape
    for n in range(n_img):                                   # 128-lane aligned slices
        o_ref[n] = res[:, n * hwp:(n + 1) * hwp].astype(o_ref.dtype)


@jax.jit
def my_model_forward(batch_list, w_oihw, b):
    """Mirrors MyModel.forward: cat(batch, dim=1) -> Conv2d(3x3, valid) -> ReLU.

    batch_list: list of NCHW arrays; w_oihw: (Cout, Cin, 3, 3); b: (Cout,).
    Returns the NCHW output, matching PyTorch semantics.
    """
    x = jnp.concatenate(batch_list, axis=1)                  # (N, Cin, H, W); ~20 KiB, negligible
    N, Cin, H, W = x.shape
    Cout = w_oihw.shape[0]
    Ho, Wo = H - (KH - 1), W - (KW - 1)
    hw = Ho * Wo
    hwp = ((hw + 127) // 128) * 128                          # per-image lane padding
    K = Cin * KH * KW

    # --- wrapper-side im2col: (K+1, N, hw), K rows ordered (ci, kh, kw) ---
    wins = jnp.stack([x[:, :, kh:kh + Ho, kw:kw + Wo]
                      for kh in range(KH) for kw in range(KW)], axis=0)   # (9, N, Cin, Ho, Wo)
    wins = wins.transpose(2, 0, 1, 3, 4)                                  # (Cin, 9, N, Ho, Wo)
    wins = wins.reshape(K, N, hw)
    ones = jnp.ones((1, N, hw), dtype=x.dtype)                            # bias row
    km = jnp.concatenate([wins, ones], axis=0)                            # (K+1, N, hw)
    km = jnp.pad(km, ((0, 0), (0, 0), (0, hwp - hw)))                     # zero-pad lanes
    patches = km.reshape(K + 1, N * hwp)

    # --- weights: OIHW -> (Cout, K) (rows = (ci, kh, kw), matches patches) + bias column ---
    w_mat = w_oihw.reshape(Cout, K).astype(x.dtype)
    w_aug = jnp.concatenate([w_mat, b.reshape(Cout, 1).astype(x.dtype)], axis=1)  # (Cout, K+1)

    out = pl.pallas_call(
        _conv3x3_relu_kernel,
        out_shape=jax.ShapeDtypeStruct((N, Cout, hwp), x.dtype),
        in_specs=[pl.BlockSpec(memory_space=pltpu.MemorySpace.VMEM)] * 2,
        out_specs=pl.BlockSpec(memory_space=pltpu.MemorySpace.VMEM),
    )(w_aug, patches)

    # Drop lane padding; (N, Cout, hw) -> NCHW is a free row-major reshape.
    return out[:, :, :hw].reshape(N, Cout, Ho, Wo)


if __name__ == "__main__":
    # Shapes consistent with the module:
    #   two tensors of (N=2, C=2, H=16, W=16) concatenated -> inp_channels=4
    #   out_channels=8, 3x3 valid conv -> output (2, 8, 14, 14)
    N, C_each, H, W = 2, 2, 16, 16
    inp_channels = 2 * C_each
    out_channels = 8

    key = jax.random.PRNGKey(0)
    k1, k2, kw_key, kb_key = jax.random.split(key, 4)

    batch = [
        jax.random.normal(k1, (N, C_each, H, W), dtype=jnp.float32),
        jax.random.normal(k2, (N, C_each, H, W), dtype=jnp.float32),
    ]
    # Deterministic parameter init (stand-in for nn.Conv2d's default init).
    fan_in = inp_channels * KH * KW
    bound = 1.0 / (fan_in ** 0.5)
    w_oihw = jax.random.uniform(kw_key, (out_channels, inp_channels, KH, KW),
                                minval=-bound, maxval=bound, dtype=jnp.float32)
    b = jax.random.uniform(kb_key, (out_channels,),
                           minval=-bound, maxval=bound, dtype=jnp.float32)

    out = my_model_forward(batch, w_oihw, b)
    out = jax.block_until_ready(out)

    # Sanity check against XLA's conv (not part of the kernel hot path).
    x_nchw = jnp.concatenate(batch, axis=1)
    ref = jax.lax.conv_general_dilated(
        x_nchw, w_oihw, window_strides=(1, 1), padding="VALID",
        dimension_numbers=("NCHW", "OIHW", "NCHW"))
    ref = jnp.maximum(ref + b[None, :, None, None], 0.0)

    assert out.shape == (N, out_channels, H - 2, W - 2)
    assert jnp.allclose(out, ref, atol=1e-4, rtol=1e-4)

    print("KERNEL_OK")
</pallas_src>

<mosaic_0001>
module attributes {stable_mosaic.version = 11 : i64} {
  func.func @_conv3x3_relu_kernel(%arg0: memref<8x37xf32, #tpu.memory_space<vmem>>, %arg1: memref<37x512xf32, #tpu.memory_space<vmem>>, %arg2: memref<2x8x256xf32, #tpu.memory_space<vmem>>) attributes {dimension_semantics = [], scalar_prefetch = 0 : i64, scratch_operands = 0 : i64, tpu.core_type = #tpu.core_type<tc>} {
    %c0 = arith.constant 0 : index
    %c0_0 = arith.constant 0 : index
    %0 = vector.load %arg0[%c0, %c0_0] : memref<8x37xf32, #tpu.memory_space<vmem>>, vector<8x37xf32>
    %c0_1 = arith.constant 0 : index
    %c0_2 = arith.constant 0 : index
    %1 = vector.load %arg1[%c0_1, %c0_2] : memref<37x512xf32, #tpu.memory_space<vmem>>, vector<37x512xf32>
    %cst = arith.constant dense<0.000000e+00> : vector<8x512xf32>
    %2 = tpu.matmul %0, %1, %cst {dimension_numbers = #tpu.dot_dimension_numbers<[1], [0], [0], [1], [0, 0, 1, 1], [], []>} : vector<8x37xf32>, vector<37x512xf32>, vector<8x512xf32> -> vector<8x512xf32>
    %cst_3 = arith.constant 0.000000e+00 : f32
    %3 = vector.broadcast %cst_3 : f32 to vector<8x512xf32>
    %4 = arith.maximumf %2, %3 : vector<8x512xf32>
    %5 = vector.extract_strided_slice %4 {offsets = [0, 0], sizes = [8, 256], strides = [1, 1]} : vector<8x512xf32> to vector<8x256xf32>
    %c0_4 = arith.constant 0 : index
    %c0_5 = arith.constant 0 : index
    %c0_6 = arith.constant 0 : index
    %6 = vector.load %arg2[%c0_4, %c0_5, %c0_6] : memref<2x8x256xf32, #tpu.memory_space<vmem>>, vector<1x8x256xf32>
    %7 = vector.shape_cast %6 : vector<1x8x256xf32> to vector<8x256xf32>
    %8 = vector.shape_cast %5 : vector<8x256xf32> to vector<1x8x256xf32>
    tpu.vector_store %arg2[%c0_4, %c0_5, %c0_6], %8 {strides = array<i32>} : memref<2x8x256xf32, #tpu.memory_space<vmem>>, vector<1x8x256xf32>,
    %9 = vector.extract_strided_slice %4 {offsets = [0, 256], sizes = [8, 256], strides = [1, 1]} : vector<8x512xf32> to vector<8x256xf32>
    %c1 = arith.constant 1 : index
    %c0_7 = arith.constant 0 : index
    %c0_8 = arith.constant 0 : index
    %10 = vector.load %arg2[%c1, %c0_7, %c0_8] : memref<2x8x256xf32, #tpu.memory_space<vmem>>, vector<1x8x256xf32>
    %11 = vector.shape_cast %10 : vector<1x8x256xf32> to vector<8x256xf32>
    %12 = vector.shape_cast %9 : vector<8x256xf32> to vector<1x8x256xf32>
    tpu.vector_store %arg2[%c1, %c0_7, %c0_8], %12 {strides = array<i32>} : memref<2x8x256xf32, #tpu.memory_space<vmem>>, vector<1x8x256xf32>,
    return
  }
}

</mosaic_0001>

<llo_original>
// kernel: my_model_forward.1
$region0: #{my_model_forward.1}
  #allocation0 [shape = 'u32[]', space=smem, size = 0x4, offset = 0x4, fixed_abs, tag = 'smem constant byte address 0x4 - core index']
  #allocation1 [shape = 'u32[144,128]{1,0:T(1,128)}', space=vmem, size = 0x12000, scoped, tag = 'internal scratch']
  %s0 = inlined_call_operand.vmem [shape: f32[8,37], index: 0, kind: input, shape index: {}]
  %s1 = inlined_call_operand.vmem [shape: f32[37,512], index: 1, kind: input, shape index: {}]
  %s2 = inlined_call_operand.vmem [shape: f32[2,8,256], index: 2, kind: output, shape index: {}]
  %s3 = sld [smem:[#allocation0]]
  $region18: #{my_model_forward.1} parent=0
    _
  %s5 = ssub.s32 1, %s3
  %s6 = scalar_select 0, %s5, %s3
  // Predicated region
  $region2: #{my_model_forward.1} parent=0 // pred_check
    _
  $region3: #{my_model_forward.1} parent=0 // pred_check_branch
    %8 = sbr.rel (0) target = $region5
  $region4: #{my_model_forward.1} parent=0 // pred_region
    _
  $region5: #{my_model_forward.1} parent=0 // pred_fallthru
    _
  // Predicated region
  $region6: #{my_model_forward.1} parent=0 // pred_check
    _
  $region7: #{my_model_forward.1} parent=0 // pred_check_branch
    %10 = sbr.rel (0) target = $region9
  $region8: #{my_model_forward.1} parent=0 // pred_region
    _
  $region9: #{my_model_forward.1} parent=0 // pred_fallthru
    _
  %v11 = vld [vmem:[%s0] sm:$0xff]
  %v12 = vld [vmem:[%s1] sm:$0xff]
  %v13 = vld [vmem:[%s1 + $0x8] sm:$0xff]
  %v14 = vld [vmem:[%s1 + $0x10] sm:$0xff]
  %v15 = vld [vmem:[%s1 + $0x18] sm:$0xff]
  %v16 = vld [vmem:[%s1 + $0x20] sm:$0xff]
  %v17 = vld [vmem:[%s1 + $0x28] sm:$0xff]
  %v18 = vld [vmem:[%s1 + $0x30] sm:$0xff]
  %v19 = vld [vmem:[%s1 + $0x38] sm:$0xff]
  %v20 = vld [vmem:[%s1 + $0x40] sm:$0xff]
  %v21 = vld [vmem:[%s1 + $0x48] sm:$0xff]
  %v22 = vld [vmem:[%s1 + $0x50] sm:$0xff]
  %v23 = vld [vmem:[%s1 + $0x58] sm:$0xff]
  %v24 = vld [vmem:[%s1 + $0x60] sm:$0xff]
  %v25 = vld [vmem:[%s1 + $0x68] sm:$0xff]
  %v26 = vld [vmem:[%s1 + $0x70] sm:$0xff]
  %v27 = vld [vmem:[%s1 + $0x78] sm:$0xff]
  %v28 = vld [vmem:[%s1 + $0x80] sm:$0x1f]
  %v29 = vld [vmem:[%s1 + $0x88] sm:$0x1f]
  %v30 = vld [vmem:[%s1 + $0x90] sm:$0x1f]
  %v31 = vld [vmem:[%s1 + $0x98] sm:$0x1f]
  %vm32 = vcmask 302080
  %v34 = vsel %vm32, %v11, 0
  %vm36 = vcmask 1044480
  %v38 = vsel %vm36, %v28, 0
  %v41 = vsel %vm36, %v29, 0
  %v44 = vsel %vm36, %v30, 0
  %v47 = vsel %vm36, %v31, 0
  %49 = vmatprep.subr.mxu0 %v13
  %50 = vmatpush1.msra.mxu0 %v12
  %51 = vmatprep.subr.mxu0 %v17
  %52 = vmatpush1.msra.mxu0 %v16
  %53 = vmatprep.subr.mxu0 %v21
  %54 = vmatpush1.msra.mxu0 %v20
  %55 = vmatprep.subr.mxu0 %v25
  %56 = vmatpush1.msra.mxu0 %v24
  %57 = vmatprep.subr.mxu0 %v41
  %58 = vmatpush1.msra.mxu0 %v38
  %59 = vmatprep.subr.mxu0 0.0
  %60 = vmatpush1.msra.mxu0 0.0
  %61 = vmatprep.subr.mxu0 0.0
  %62 = vmatpush1.msra.mxu0 0.0
  %63 = vmatprep.subr.mxu0 0.0
  %64 = vmatpush1.msra.mxu0 0.0
  %65 = vmatprep.subr.mxu0 0.0
  %66 = vmatpush1.msra.mxu0 0.0
  %67 = vmatprep.subr.mxu0 0.0
  %68 = vmatpush1.msra.mxu0 0.0
  %69 = vmatprep.subr.mxu0 0.0
  %70 = vmatpush1.msra.mxu0 0.0
  %71 = vmatprep.subr.mxu0 0.0
  %72 = vmatpush1.msra.mxu0 0.0
  %73 = vmatprep.subr.mxu0 0.0
  %74 = vmatpush1.msra.mxu0 0.0
  %75 = vmatprep.subr.mxu0 0.0
  %76 = vmatpush1.msra.mxu0 0.0
  %77 = vmatprep.subr.mxu0 0.0
  %78 = vmatpush1.msra.mxu0 0.0
  %79 = vmatprep.subr.mxu0 0.0
  %80 = vmatpush1.msra.mxu0 0.0
  %81 = vmatprep.subr.mxu0 0.0
  %82 = vmatpush1.msra.mxu0 0.0
  %83 = vmatprep.subr.mxu0 0.0
  %84 = vmatpush1.msra.mxu0 0.0
  %85 = vmatprep.subr.mxu0 0.0
  %86 = vmatpush1.msra.mxu0 0.0
  %87 = vmatprep.subr.mxu0 0.0
  %88 = vmatpush1.msra.mxu0 0.0
  %89 = vmatprep.subr.mxu0 0.0
  %90 = vmatpush1.msra.mxu0 0.0
  %91 = vmatprep.subr.mxu0 0.0
  %92 = vmatpush1.msra.mxu0 0.0
  %93 = vmatprep.subr.mxu0 0.0
  %94 = vmatpush1.msra.mxu0 0.0
  %95 = vmatprep.subr.mxu0 0.0
  %96 = vmatpush1.msra.mxu0 0.0
  %97 = vmatprep.subr.mxu0 0.0
  %98 = vmatpush1.msra.mxu0 0.0
  %99 = vmatprep.subr.mxu0 0.0
  %100 = vmatpush1.msra.mxu0 0.0
  %101 = vmatprep.subr.mxu0 0.0
  %102 = vmatpush1.msra.mxu0 0.0
  %103 = vmatprep.subr.mxu0 0.0
  %104 = vmatpush1.msra.mxu0 0.0
  %105 = vmatprep.subr.mxu0 0.0
  %106 = vmatpush1.msra.mxu0 0.0
  %107 = vmatprep.subr.mxu0 0.0
  %108 = vmatpush1.msra.mxu0 0.0
  %109 = vmatprep.subr.mxu0 0.0
  %110 = vmatpush1.msra.mxu0 0.0
  %111 = vmatprep.subr.mxu0 0.0
  %112 = vmatpush1.msra.mxu0 0.0
  %113 = vmatprep.mubr.f32.mxu0 0.0
  %114 = vmatmul.mubr.f32.gmra.mrb[0].mxu0 %v34
  %v115 = vpop.f32.mrb[0].mxu0
  %v116 = vadd.f32 0.0, %v115
  %v117 = vpop.f32.mrb[0].mxu0
  %v118 = vadd.f32 0.0, %v117
  %119 = vdwg.mxu0
  %120 = vmatprep.subr.mxu0 %v15
  %121 = vmatpush1.msra.mxu0 %v14
  %122 = vmatprep.subr.mxu0 %v19
  %123 = vmatpush1.msra.mxu0 %v18
  %124 = vmatprep.subr.mxu0 %v23
  %125 = vmatpush1.msra.mxu0 %v22
  %126 = vmatprep.subr.mxu0 %v27
  %127 = vmatpush1.msra.mxu0 %v26
  %128 = vmatprep.subr.mxu0 %v47
  %129 = vmatpush1.msra.mxu0 %v44
  %130 = vmatprep.subr.mxu0 0.0
  %131 = vmatpush1.msra.mxu0 0.0
  %132 = vmatprep.subr.mxu0 0.0
  %133 = vmatpush1.msra.mxu0 0.0
  %134 = vmatprep.subr.mxu0 0.0
  %135 = vmatpush1.msra.mxu0 0.0
  %136 = vmatprep.subr.mxu0 0.0
  %137 = vmatpush1.msra.mxu0 0.0
  %138 = vmatprep.subr.mxu0 0.0
  %139 = vmatpush1.msra.mxu0 0.0
  %140 = vmatprep.subr.mxu0 0.0
  %141 = vmatpush1.msra.mxu0 0.0
  %142 = vmatprep.subr.mxu0 0.0
  %143 = vmatpush1.msra.mxu0 0.0
  %144 = vmatprep.subr.mxu0 0.0
  %145 = vmatpush1.msra.mxu0 0.0
  %146 = vmatprep.subr.mxu0 0.0
  %147 = vmatpush1.msra.mxu0 0.0
  %148 = vmatprep.subr.mxu0 0.0
  %149 = vmatpush1.msra.mxu0 0.0
  %150 = vmatprep.subr.mxu0 0.0
  %151 = vmatpush1.msra.mxu0 0.0
  %152 = vmatprep.subr.mxu0 0.0
  %153 = vmatpush1.msra.mxu0 0.0
  %154 = vmatprep.subr.mxu0 0.0
  %155 = vmatpush1.msra.mxu0 0.0
  %156 = vmatprep.subr.mxu0 0.0
  %157 = vmatpush1.msra.mxu0 0.0
  %158 = vmatprep.subr.mxu0 0.0
  %159 = vmatpush1.msra.mxu0 0.0
  %160 = vmatprep.subr.mxu0 0.0
  %161 = vmatpush1.msra.mxu0 0.0
  %162 = vmatprep.subr.mxu0 0.0
  %163 = vmatpush1.msra.mxu0 0.0
  %164 = vmatprep.subr.mxu0 0.0
  %165 = vmatpush1.msra.mxu0 0.0
  %166 = vmatprep.subr.mxu0 0.0
  %167 = vmatpush1.msra.mxu0 0.0
  %168 = vmatprep.subr.mxu0 0.0
  %169 = vmatpush1.msra.mxu0 0.0
  %170 = vmatprep.subr.mxu0 0.0
  %171 = vmatpush1.msra.mxu0 0.0
  %172 = vmatprep.subr.mxu0 0.0
  %173 = vmatpush1.msra.mxu0 0.0
  %174 = vmatprep.subr.mxu0 0.0
  %175 = vmatpush1.msra.mxu0 0.0
  %176 = vmatprep.subr.mxu0 0.0
  %177 = vmatpush1.msra.mxu0 0.0
  %178 = vmatprep.subr.mxu0 0.0
  %179 = vmatpush1.msra.mxu0 0.0
  %180 = vmatprep.subr.mxu0 0.0
  %181 = vmatpush1.msra.mxu0 0.0
  %182 = vmatprep.subr.mxu0 0.0
  %183 = vmatpush1.msra.mxu0 0.0
  %184 = vmatprep.mubr.f32.mxu0 0.0
  %185 = vmatmul.mubr.f32.gmra.mrb[0].mxu0 %v34
  %v186 = vpop.f32.mrb[0].mxu0
  %v187 = vadd.f32 0.0, %v186
  %v188 = vpop.f32.mrb[0].mxu0
  %v189 = vadd.f32 0.0, %v188
  %190 = vdwg.mxu0
  %v191 = vmax.f32 %v116, 0.0
  %v192 = vmax.f32 %v118, 0.0
  %v193 = vmax.f32 %v187, 0.0
  %v194 = vmax.f32 %v189, 0.0
  %195 = vst [vmem:[%s2] sm:$0xff] %v191
  %196 = vst [vmem:[%s2 + $0x8] sm:$0xff] %v192
  %s197 = scalar_lea.vmem %s2, 16
  %198 = vst [vmem:[%s197] sm:$0xff] %v193
  %199 = vst [vmem:[%s197 + $0x8] sm:$0xff] %v194
  // Predicated region
  $region10: #{my_model_forward.1} parent=0 // pred_check
    _
  $region11: #{my_model_forward.1} parent=0 // pred_check_branch
    %201 = sbr.rel (0) target = $region13
  $region12: #{my_model_forward.1} parent=0 // pred_region
    _
  $region13: #{my_model_forward.1} parent=0 // pred_fallthru
    _
  // Predicated region
  $region14: #{my_model_forward.1} parent=0 // pred_check
    _
  $region15: #{my_model_forward.1} parent=0 // pred_check_branch
    %203 = sbr.rel (0) target = $region17
  $region16: #{my_model_forward.1} parent=0 // pred_region
    _
  $region17: #{my_model_forward.1} parent=0 // pred_fallthru
    _

</llo_original>
